<compile_context>
chip_gen: v6e
topology: v6e:2x2x1
jax: 0.10.0
libtpu: 0.0.40
codegen_flags: <defaults>
</compile_context>

<pallas_src>
import jax
import jax.numpy as jnp
from jax.experimental import pallas as pl
from jax.experimental.pallas import tpu as pltpu


def _softplus(x):
    # Numerically stable softplus, matches torch.nn.functional.softplus.
    return jnp.maximum(x, 0.0) + jnp.log1p(jnp.exp(-jnp.abs(x)))


# ---------------------------------------------------------------------------
# Kernel: ret = softplus(alpha)*vecU - (softplus(lam)/sum(softplus(lam))) @ vecX
# ---------------------------------------------------------------------------
def _constraint_kernel(alpha_ref, lam_ref, x_ref, u_ref, ret_ref):
    # alpha arrives on the scalar path (SMEM); splat to a (1,1) vreg so the
    # softplus runs on the EUP and the multiply is a cheap lane broadcast.
    a = alpha_ref[0]
    alpha_sp = _softplus(jnp.full((1, 1), a, dtype=jnp.float32))      # (1, 1)

    # Lambda normalization: softplus (EUP) -> sublane sum (XLU) -> exact
    # divide (VPU).  lambda is an (N, 1) column.
    tmp0 = _softplus(lam_ref[...])                                    # (N, 1)
    denom = jnp.sum(tmp0, axis=0, keepdims=True)                      # (1, 1)
    lam = tmp0 / denom                                                # (N, 1)

    # (1,N)@(N,M) as VPU multiply + sublane reduce — no MXU for tiny N.
    lx = jnp.sum(lam * x_ref[...], axis=0, keepdims=True)             # (1, M)

    ret_ref[...] = alpha_sp * u_ref[...] - lx                         # (1, M)


def convex_problem_model(alpha_para, lambda_para, vecX, vecU):
    """Returns (loss, ret).

    loss == module.forward(); ret == module.constraint_equality().
    alpha_para: (1,), lambda_para: (N,), vecX: (N, M), vecU: (M,)
    """
    N, M = vecX.shape

    alpha = alpha_para.astype(jnp.float32).reshape(1)
    lam_col = lambda_para.astype(jnp.float32).reshape(N, 1)
    x = vecX.astype(jnp.float32)
    u_row = vecU.astype(jnp.float32).reshape(1, M)

    # forward(): a single tiny elementwise fusion in the wrapper — cheaper than
    # a padded (1,1) VMEM output tile and its writeback DMA in the kernel.
    loss = -_softplus(alpha)[0]

    ret_row = pl.pallas_call(
        _constraint_kernel,
        out_shape=jax.ShapeDtypeStruct((1, M), jnp.float32),
        in_specs=[
            pl.BlockSpec(memory_space=pltpu.MemorySpace.SMEM),   # alpha scalar
            pl.BlockSpec((N, 1), lambda: (0, 0)),                # lambda column
            pl.BlockSpec((N, M), lambda: (0, 0)),                # vecX (full block)
            pl.BlockSpec((1, M), lambda: (0, 0)),                # vecU (full block)
        ],
        out_specs=pl.BlockSpec((1, M), lambda: (0, 0)),          # ret (full block)
    )(alpha, lam_col, x, u_row)

    return loss, ret_row[0]


if __name__ == "__main__":
    key = jax.random.PRNGKey(0)
    k1, k2, k3, k4 = jax.random.split(key, 4)

    # Small shapes consistent with the module: vecX is (N, M), vecU is (M,),
    # lambda_para has len(vecX) == N entries, alpha_para has 1 entry.
    N, M = 8, 16
    alpha_para = jax.random.uniform(k1, (1,), minval=-1.0, maxval=1.0,
                                    dtype=jnp.float32)
    lambda_para = jax.random.uniform(k2, (N,), minval=-1.0, maxval=1.0,
                                     dtype=jnp.float32)
    vecX = jax.random.uniform(k3, (N, M), minval=-1.0, maxval=1.0,
                              dtype=jnp.float32)
    vecU = jax.random.uniform(k4, (M,), minval=-1.0, maxval=1.0,
                              dtype=jnp.float32)

    loss, ret = convex_problem_model(alpha_para, lambda_para, vecX, vecU)
    jax.block_until_ready((loss, ret))

    # Reference in plain JAX.
    loss_ref = -jax.nn.softplus(alpha_para[0])
    tmp0 = jax.nn.softplus(lambda_para)
    lam_ref = tmp0 / jnp.sum(tmp0)
    ret_ref = jax.nn.softplus(alpha_para) * vecU - lam_ref @ vecX

    assert jnp.allclose(loss, loss_ref, atol=1e-6), (loss, loss_ref)
    assert jnp.allclose(ret, ret_ref, atol=1e-6, rtol=1e-6), (ret, ret_ref)

    print("KERNEL_OK")
</pallas_src>

<mosaic_0001>
module attributes {stable_mosaic.version = 11 : i64} {
  func.func @_constraint_kernel(%arg0: memref<1xf32, #tpu.memory_space<smem>>, %arg1: memref<8x1xf32, #tpu.memory_space<vmem>>, %arg2: memref<8x16xf32, #tpu.memory_space<vmem>>, %arg3: memref<1x16xf32, #tpu.memory_space<vmem>>, %arg4: memref<1x16xf32, #tpu.memory_space<vmem>>) attributes {dimension_semantics = [], scalar_prefetch = 0 : i64, scratch_operands = 0 : i64, tpu.core_type = #tpu.core_type<tc>} {
    %c0 = arith.constant 0 : index
    %0 = memref.load %arg0[%c0] : memref<1xf32, #tpu.memory_space<smem>>
    %1 = vector.broadcast %0 : f32 to vector<1x1xf32>
    %cst = arith.constant 0.000000e+00 : f32
    %2 = vector.broadcast %cst : f32 to vector<1x1xf32>
    %3 = arith.maximumf %1, %2 : vector<1x1xf32>
    %4 = math.absf %1 : vector<1x1xf32>
    %cst_0 = arith.constant 0.000000e+00 : f32
    %5 = vector.broadcast %cst_0 : f32 to vector<1x1xf32>
    %6 = arith.subf %5, %4 : vector<1x1xf32>
    %7 = math.exp %6 : vector<1x1xf32>
    %8 = math.log1p %7 : vector<1x1xf32>
    %9 = arith.addf %3, %8 : vector<1x1xf32>
    %c0_1 = arith.constant 0 : index
    %c0_2 = arith.constant 0 : index
    %10 = vector.load %arg1[%c0_1, %c0_2] : memref<8x1xf32, #tpu.memory_space<vmem>>, vector<8x1xf32>
    %cst_3 = arith.constant 0.000000e+00 : f32
    %11 = vector.broadcast %cst_3 : f32 to vector<8x1xf32>
    %12 = arith.maximumf %10, %11 : vector<8x1xf32>
    %13 = math.absf %10 : vector<8x1xf32>
    %cst_4 = arith.constant 0.000000e+00 : f32
    %14 = vector.broadcast %cst_4 : f32 to vector<8x1xf32>
    %15 = arith.subf %14, %13 : vector<8x1xf32>
    %16 = math.exp %15 : vector<8x1xf32>
    %17 = math.log1p %16 : vector<8x1xf32>
    %18 = arith.addf %12, %17 : vector<8x1xf32>
    %cst_5 = arith.constant dense<0.000000e+00> : vector<1xf32>
    %19 = vector.multi_reduction <add>, %18, %cst_5 [0] : vector<8x1xf32> to vector<1xf32>
    %20 = vector.shape_cast %19 : vector<1xf32> to vector<1x1xf32>
    %21 = vector.broadcast %20 : vector<1x1xf32> to vector<8x1xf32>
    %22 = arith.divf %18, %21 : vector<8x1xf32>
    %c0_6 = arith.constant 0 : index
    %c0_7 = arith.constant 0 : index
    %23 = vector.load %arg2[%c0_6, %c0_7] : memref<8x16xf32, #tpu.memory_space<vmem>>, vector<8x16xf32>
    %24 = vector.broadcast %22 : vector<8x1xf32> to vector<8x16xf32>
    %25 = arith.mulf %24, %23 : vector<8x16xf32>
    %cst_8 = arith.constant dense<0.000000e+00> : vector<16xf32>
    %26 = vector.multi_reduction <add>, %25, %cst_8 [0] : vector<8x16xf32> to vector<16xf32>
    %27 = vector.shape_cast %26 : vector<16xf32> to vector<1x16xf32>
    %c0_9 = arith.constant 0 : index
    %c0_10 = arith.constant 0 : index
    %28 = vector.load %arg3[%c0_9, %c0_10] : memref<1x16xf32, #tpu.memory_space<vmem>>, vector<1x16xf32>
    %29 = vector.broadcast %9 : vector<1x1xf32> to vector<1x16xf32>
    %30 = arith.mulf %29, %28 : vector<1x16xf32>
    %31 = arith.subf %30, %27 : vector<1x16xf32>
    %c0_11 = arith.constant 0 : index
    %c0_12 = arith.constant 0 : index
    %32 = vector.load %arg4[%c0_11, %c0_12] : memref<1x16xf32, #tpu.memory_space<vmem>>, vector<1x16xf32>
    tpu.vector_store %arg4[%c0_11, %c0_12], %31 {strides = array<i32>} : memref<1x16xf32, #tpu.memory_space<vmem>>, vector<1x16xf32>,
    return
  }
}

</mosaic_0001>

<llo_original>
// kernel: tpu_custom_call.1
$region0: #{tpu_custom_call.1}
  #allocation0 [shape = 'u32[]', space=smem, size = 0x4, offset = 0x4, fixed_abs, tag = 'smem constant byte address 0x4 - core index']
  #allocation1 [shape = 'u32[144,128]{1,0:T(1,128)}', space=vmem, size = 0x12000, scoped, tag = 'internal scratch']
  #allocation2 [shape = 'f32[1]{0:T(128)S(6)}', space=smem, size = 0x200, scoped, tag = 'scoped memory for tpu_custom_call.1']
  %s0 = inlined_call_operand.<no memory space> [shape: f32[1], index: 0, kind: input, shape index: {}]
  %s1 = inlined_call_operand.vmem [shape: f32[8,1], index: 1, kind: input, shape index: {}]
  %s2 = inlined_call_operand.vmem [shape: f32[8,16], index: 2, kind: input, shape index: {}]
  %s3 = inlined_call_operand.vmem [shape: f32[1,16], index: 3, kind: input, shape index: {}]
  %s4 = inlined_call_operand.hbm [shape: f32[1,16], index: 4, kind: output, shape index: {}]
  %s5 = sld [smem:[#allocation0]]
  $region26: #{tpu_custom_call.1} parent=0
    _
  %s7 = ssub.s32 1, %s5
  %s8 = scalar_select 0, %s7, %s5
  %9 = sst [smem:[#allocation2]] %s0
  $region1: #{tpu_custom_call.1} parent=0
    #allocation3 [shape = 'u8[512]{0}', space=vmem, size = 0x400, scoped, tag = 'output window, operand 0, single buffered']
    #allocation4 [shape = 's32[1]{0}', space=sflag, size = 0x4, scoped, tag = 'scoped memory for tpu_custom_call.1']
    %10 = vsyncpa [#allocation4], 0
    // Predicated region
    $region2: #{tpu_custom_call.1} parent=1 // pred_check
      _
    $region3: #{tpu_custom_call.1} parent=1 // pred_check_branch
      %12 = sbr.rel (0) target = $region5
    $region4: #{tpu_custom_call.1} parent=1 // pred_region
      _
    $region5: #{tpu_custom_call.1} parent=1 // pred_fallthru
      _
    // Predicated region
    $region6: #{tpu_custom_call.1} parent=1 // pred_check
      _
    $region7: #{tpu_custom_call.1} parent=1 // pred_check_branch
      %14 = sbr.rel (0) target = $region9
    $region8: #{tpu_custom_call.1} parent=1 // pred_region
      _
    $region9: #{tpu_custom_call.1} parent=1 // pred_fallthru
      _
    // Predicated region
    $region10: #{tpu_custom_call.1} parent=1 // pred_check
      _
    $region11: #{tpu_custom_call.1} parent=1 // pred_check_branch
      %16 = sbr.rel (0) target = $region13
    $region12: #{tpu_custom_call.1} parent=1 // pred_region
      _
    $region13: #{tpu_custom_call.1} parent=1 // pred_fallthru
      _
    // Predicated region
    $region14: #{tpu_custom_call.1} parent=1 // pred_check
      _
    $region15: #{tpu_custom_call.1} parent=1 // pred_check_branch
      %18 = sbr.rel (0) target = $region17
    $region16: #{tpu_custom_call.1} parent=1 // pred_region
      _
    $region17: #{tpu_custom_call.1} parent=1 // pred_fallthru
      _
    %s19 = sld [smem:[#allocation2]]
    %v20 = vstv %s19
    %v21 = vmax.f32 %v20, 0.0
    %v22 = vand.u32 2147483647, %v20
    %v23 = vsub.f32 0.0, %v22
    %v24 = vmul.f32 %v23, 1.442695
    %v25 = vpow.pop %v24
    %v26 = vadd.f32 %v25, 1.0
    %v27 = vlog2.pop %v26
    %v28 = vmul.f32 %v27, 0.6931472
    %v29 = vmul.f32 -0.5, %v25
    %v30 = vadd.f32 %v29, 1.0
    %v31 = vmul.f32 %v30, %v25
    %v32 = vand.u32 2147483647, %v25
    %vm33 = vcmp.lt.f32.partialorder %v32, 0.0004427343
    %v34 = vsel %vm33, %v31, %v28
    %v35 = vadd.f32 %v21, %v34
    %v36 = vld [vmem:[%s1] sm:$0xff]
    %v37 = vmax.f32 %v36, 0.0
    %v38 = vand.u32 2147483647, %v36
    %v39 = vsub.f32 0.0, %v38
    %v40 = vmul.f32 %v39, 1.442695
    %v41 = vpow.pop %v40
    %v42 = vadd.f32 %v41, 1.0
    %v43 = vlog2.pop %v42
    %v44 = vmul.f32 %v43, 0.6931472
    %v45 = vmul.f32 -0.5, %v41
    %v46 = vadd.f32 %v45, 1.0
    %v47 = vmul.f32 %v46, %v41
    %v48 = vand.u32 2147483647, %v41
    %vm49 = vcmp.lt.f32.partialorder %v48, 0.0004427343
    %v50 = vsel %vm49, %v47, %v44
    %v51 = vadd.f32 %v37, %v50
    %vm52 = vcmask 7168
    %v53 = vsel %vm52, %v51, 0.0
    %v54 = vrot.slane %v53, 4
    %v55 = vadd.f32 %v53, %v54
    %v56 = vrot.slane %v55, 2
    %v57 = vadd.f32 %v55, %v56
    %v58 = vrot.slane %v57, 1
    %v59 = vadd.f32 %v57, %v58
    %v60 = vrcp.pop %v59
    %v61 = vmul.f32 %v51, %v60
    %v62 = vld [vmem:[%s2] sm:$0xff]
    %64 = vset.pattern.permute.xlu0 0
    %65 = vperm.xlu0 %64, %v61
    %v66 = vpop.permute.xlu0 %65
    %v68 = vmul.f32 %v66, %v62
    %vm69 = vcmask 130048
    %v70 = vsel %vm69, %v68, 0.0
    %v71 = vrot.slane %v70, 4
    %v72 = vadd.f32 %v70, %v71
    %v73 = vrot.slane %v72, 2
    %v74 = vadd.f32 %v72, %v73
    %v75 = vrot.slane %v74, 1
    %v76 = vadd.f32 %v74, %v75
    %v77 = vld [vmem:[%s3] sm:$0x1]
    %v78 = vmul.f32 %v35, %v77
    %v79 = vsub.f32 %v78, %v76
    %vm80 = vcmask 122880
    %81 = vst.msk [vmem:[#allocation3] sm:$0x1] %vm80, %v79
    // Predicated region
    $region18: #{tpu_custom_call.1} parent=1 // pred_check
      _
    $region19: #{tpu_custom_call.1} parent=1 // pred_check_branch
      %83 = sbr.rel (0) target = $region21
    $region20: #{tpu_custom_call.1} parent=1 // pred_region
      %s85 = ssub.s32 16, 16
      %86 = vsyncadd [#allocation4], %s85
      %s88 = sshll.u32 [#allocation3], 4
      %s89 = int_to_ptr.vmem [resolvable:$true] %s88
      %91 = dma.vmem_to_hbm [thread:$0]  %s89, 16, %s4, [#allocation4]
    $region21: #{tpu_custom_call.1} parent=1 // pred_fallthru
      _
    // Predicated region
    $region22: #{tpu_custom_call.1} parent=1 // pred_check
      _
    $region23: #{tpu_custom_call.1} parent=1 // pred_check_branch
      %93 = sbr.rel (0) target = $region25
    $region24: #{tpu_custom_call.1} parent=1 // pred_region
      %94 = dma.done [#allocation4], 16
    $region25: #{tpu_custom_call.1} parent=1 // pred_fallthru
      _
    %95 = vsyncpa [#allocation4], 1

</llo_original>
